<compile_context>
chip_gen: v5e
topology: v5e:2x2
jax: 0.10.0
libtpu: 0.0.40
codegen_flags: <defaults>
</compile_context>

<pallas_src>
import numpy as np
import jax
import jax.numpy as jnp
from jax.experimental import pallas as pl
from jax.experimental.pallas import tpu as pltpu


def _round_up(n, m):
    return ((n + m - 1) // m) * m


# ----------------------------- Pallas kernel ------------------------------ #
def gam_kernel(x_ref,
               w0_ref, b0_ref,
               w1_ref, b1_ref,
               w2_ref, b2_ref,
               w3_ref, bias_ref,
               out_ref):
    """Block-sparse MLP chain with folded last layer, one batch tile per step."""
    # layer 0 (masked dense) + relu   -- bf16 MXU inputs, f32 accumulate
    h = jnp.dot(x_ref[...].astype(jnp.bfloat16), w0_ref[...],
                preferred_element_type=jnp.float32) + b0_ref[...]
    h = jnp.maximum(h, 0.0)
    # layer 1 + relu
    h = jnp.dot(h.astype(jnp.bfloat16), w1_ref[...],
                preferred_element_type=jnp.float32) + b1_ref[...]
    h = jnp.maximum(h, 0.0)
    # layer 2 + relu
    h = jnp.dot(h.astype(jnp.bfloat16), w2_ref[...],
                preferred_element_type=jnp.float32) + b2_ref[...]
    h = jnp.maximum(h, 0.0)
    # folded layer 3 + row-sum + scalar bias on VPU (mul) + XLU (lane reduce):
    #   out = (h @ W3.T + b3).sum(1) + bias == sum(h * (W3^T @ 1), -1) + (sum(b3)+bias)
    out_ref[...] = (jnp.sum(h * w3_ref[...], axis=-1, keepdims=True)
                    + bias_ref[0, 0])


# ----------------------------- parameter setup ---------------------------- #
def build_grad_masks(feat_in, all_indices, small_sizes):
    length = len(small_sizes) - 1
    sizes = [feat_in] + [len(all_indices) * small_sizes[k]
                         for k in range(1, length + 1)]
    masks = []
    for k in range(length):
        mask = np.zeros((sizes[k + 1], sizes[k]), dtype=np.float32)
        size_k1 = 0
        size_k2 = 0
        for j, index in enumerate(all_indices):
            curr_k2 = small_sizes[k + 1]
            if k == 0:
                for i in index:
                    mask[size_k2:size_k2 + curr_k2, i] = 1.0
            else:
                curr_k1 = small_sizes[k]
                mask[size_k2:size_k2 + curr_k2, size_k1:size_k1 + curr_k1] = 1.0
                size_k1 += curr_k1
            size_k2 += curr_k2
        masks.append(mask)
    return sizes, masks


def init_params(key, feat_in, all_indices, small_sizes):
    """Deterministic init mirroring nn.Linear default + the module's masking."""
    length = len(small_sizes) - 1
    ngroups = len(all_indices)
    sizes, masks = build_grad_masks(feat_in, all_indices, small_sizes)

    keys = jax.random.split(key, 2 * length)
    params = []
    for k in range(length):
        fan_in = sizes[k]
        bound = 1.0 / np.sqrt(fan_in)
        W = jax.random.uniform(keys[2 * k], (sizes[k + 1], sizes[k]),
                               dtype=jnp.float32, minval=-bound, maxval=bound)
        b = jax.random.uniform(keys[2 * k + 1], (sizes[k + 1],),
                               dtype=jnp.float32, minval=-bound, maxval=bound)
        W = W * masks[k]                      # block-sparse masking
        if k != 0:
            W = W * np.sqrt(ngroups)          # rescale (mask is 0/1, once is enough)
            b = b * np.sqrt(ngroups)
        params.append((W, b))
    scalar_bias = jnp.zeros((1,), dtype=jnp.float32)  # self.bias
    return sizes, params, scalar_bias


def pack_params(params, scalar_bias):
    """One-time pack: transpose, fold last layer, cast weights to bf16.

    No zero-padding: BlockSpec blocks equal to the full (small) arrays are
    legal, and trimming the resident weights halves their VMEM footprint.
    """
    (W0, b0), (W1, b1), (W2, b2), (W3, b3) = params

    def wt(W):                                 # (out, in) -> (in, out), bf16 for MXU
        return jnp.asarray(W, jnp.float32).T.astype(jnp.bfloat16)

    def brow(b):                               # (out,) -> (1, out), f32 for VPU add
        return jnp.asarray(b, jnp.float32)[None, :]

    # fold layer 3 (no activation) + row-sum + scalar bias
    w3_row = jnp.sum(jnp.asarray(W3, jnp.float32), axis=0)[None, :]      # (1, d2)
    b_total = (jnp.sum(jnp.asarray(b3, jnp.float32))
               + jnp.asarray(scalar_bias, jnp.float32).reshape(())).reshape(1, 1)

    return {
        "w0t": wt(W0), "b0": brow(b0),
        "w1t": wt(W1), "b1": brow(b1),
        "w2t": wt(W2), "b2": brow(b2),
        "w3row": w3_row, "b_total": b_total,
    }


# ------------------------------- wrapper ----------------------------------- #
def blocksparse_gam_forward(x, packed, num_groups, tb_max=4096):
    B, F = x.shape
    d0 = packed["w0t"].shape[1]
    d1 = packed["w1t"].shape[1]
    d2 = packed["w2t"].shape[1]

    # batch tile: large to amortize per-step pipeline overhead, capped for
    # v7x VMEM headroom; pad batch only (features stay at true width).
    TB = min(tb_max, 8192) if B >= tb_max else _round_up(max(B, 8), 8)
    B_pad = _round_up(B, TB)
    x_p = x.astype(jnp.float32)
    if B_pad != B:
        x_p = jnp.pad(x_p, ((0, B_pad - B), (0, 0)))

    n_tiles = pl.cdiv(B_pad, TB)
    const = lambda shape: pl.BlockSpec(shape, lambda i: (0, 0))

    # advisory cost hint for XLA's scheduler
    flops = 2 * B_pad * (F * d0 + d0 * d1 + d1 * d2 + d2)
    bytes_accessed = (
        x_p.size * 4 + B_pad * 4
        + 2 * (packed["w0t"].size + packed["w1t"].size + packed["w2t"].size)
        + 4 * (packed["b0"].size + packed["b1"].size + packed["b2"].size
               + packed["w3row"].size + 1))
    cost = pl.CostEstimate(flops=flops, transcendentals=0,
                           bytes_accessed=bytes_accessed)

    out_full = pl.pallas_call(
        gam_kernel,
        out_shape=jax.ShapeDtypeStruct((B_pad, 1), jnp.float32),
        grid=(n_tiles,),
        in_specs=[
            pl.BlockSpec((TB, F), lambda i: (i, 0)),     # x tile (pipelined, true width)
            const((F, d0)),  const((1, d0)),             # W0^T (bf16), b0   (resident)
            const((d0, d1)), const((1, d1)),             # W1^T (bf16), b1
            const((d1, d2)), const((1, d2)),             # W2^T (bf16), b2
            const((1, d2)),                              # folded W3 column-sum row
            pl.BlockSpec((1, 1), lambda i: (0, 0),
                         memory_space=pltpu.MemorySpace.SMEM),   # folded scalar bias
        ],
        out_specs=pl.BlockSpec((TB, 1), lambda i: (i, 0)),
        compiler_params=pltpu.CompilerParams(
            dimension_semantics=("parallel",)),
        cost_estimate=cost,
    )(x_p,
      packed["w0t"], packed["b0"],
      packed["w1t"], packed["b1"],
      packed["w2t"], packed["b2"],
      packed["w3row"], packed["b_total"])

    out = out_full[:B]
    # shape_loss is just zeros — plain JAX glue, no kernel needed.
    shape_loss = jnp.zeros((num_groups,), dtype=jnp.float32)
    return out, shape_loss


# ------------------------------ references -------------------------------- #
def reference_forward_f32(x, params, scalar_bias):
    """Pure-f32, unfused reference (module semantics)."""
    h = x
    L = len(params)
    for k, (W, b) in enumerate(params):
        h = h @ W.T + b
        if k != L - 1:
            h = jnp.maximum(h, 0.0)
    out = jnp.sum(h, axis=1, keepdims=True) + scalar_bias[0]
    return out


def reference_forward_kernel_math(x, packed):
    """Same arithmetic as the kernel (bf16 MXU inputs, f32 accumulate, fold)."""
    h = x.astype(jnp.float32)
    h = jnp.dot(h.astype(jnp.bfloat16), packed["w0t"],
                preferred_element_type=jnp.float32) + packed["b0"]
    h = jnp.maximum(h, 0.0)
    h = jnp.dot(h.astype(jnp.bfloat16), packed["w1t"],
                preferred_element_type=jnp.float32) + packed["b1"]
    h = jnp.maximum(h, 0.0)
    h = jnp.dot(h.astype(jnp.bfloat16), packed["w2t"],
                preferred_element_type=jnp.float32) + packed["b2"]
    h = jnp.maximum(h, 0.0)
    return jnp.sum(h * packed["w3row"], axis=-1, keepdims=True) + packed["b_total"][0, 0]


# --------------------------------- main ------------------------------------ #
if __name__ == "__main__":
    key = jax.random.PRNGKey(0)
    k_param, k_x = jax.random.split(key)

    # small, module-consistent shapes
    feat_in = 8
    all_indices = [[0, 1], [2, 3], [4, 5], [6, 7]]   # 4 shape-function groups
    small_sizes = [0, 16, 12, 8, 1]
    batch = 32

    sizes, params, scalar_bias = init_params(k_param, feat_in, all_indices,
                                             small_sizes)
    packed = pack_params(params, scalar_bias)   # one-time pack (transpose/fold/bf16)
    x = jax.random.normal(k_x, (batch, feat_in), dtype=jnp.float32)

    out, shape_loss = blocksparse_gam_forward(x, packed, len(all_indices))
    out = jax.block_until_ready(out)
    shape_loss = jax.block_until_ready(shape_loss)

    assert out.shape == (batch, 1)
    assert shape_loss.shape == (len(all_indices),)

    # tight check against a reference with identical (bf16-dot) arithmetic
    ref_bf16 = reference_forward_kernel_math(x, packed)
    assert np.allclose(np.asarray(out), np.asarray(ref_bf16),
                       rtol=1e-3, atol=1e-4)
    # loose sanity check against the pure-f32 module semantics
    ref_f32 = reference_forward_f32(x, params, scalar_bias)
    assert np.allclose(np.asarray(out), np.asarray(ref_f32),
                       rtol=5e-2, atol=5e-2)

    print("KERNEL_OK")
</pallas_src>

<mosaic_0001>
module attributes {stable_mosaic.version = 11 : i64} {
  func.func @gam_kernel(%arg0: i32, %arg1: memref<32x8xf32, #tpu.memory_space<vmem>>, %arg2: memref<8x64xbf16, #tpu.memory_space<vmem>>, %arg3: memref<1x64xf32, #tpu.memory_space<vmem>>, %arg4: memref<64x48xbf16, #tpu.memory_space<vmem>>, %arg5: memref<1x48xf32, #tpu.memory_space<vmem>>, %arg6: memref<48x32xbf16, #tpu.memory_space<vmem>>, %arg7: memref<1x32xf32, #tpu.memory_space<vmem>>, %arg8: memref<1x32xf32, #tpu.memory_space<vmem>>, %arg9: memref<1x1xf32, #tpu.memory_space<smem>>, %arg10: memref<32x1xf32, #tpu.memory_space<vmem>>) attributes {dimension_semantics = [#tpu.dimension_semantics<parallel>], iteration_bounds = array<i64: 1>, scalar_prefetch = 0 : i64, scratch_operands = 0 : i64, tpu.core_type = #tpu.core_type<tc>, window_params = [{transform_indices = @transform_0, window_bounds = array<i64: 32, 8>}, {pipeline_mode = #tpu.pipeline_mode<synchronous>, transform_indices = @transform_1, window_bounds = array<i64: 8, 64>}, {pipeline_mode = #tpu.pipeline_mode<synchronous>, transform_indices = @transform_2, window_bounds = array<i64: 1, 64>}, {pipeline_mode = #tpu.pipeline_mode<synchronous>, transform_indices = @transform_3, window_bounds = array<i64: 64, 48>}, {pipeline_mode = #tpu.pipeline_mode<synchronous>, transform_indices = @transform_4, window_bounds = array<i64: 1, 48>}, {pipeline_mode = #tpu.pipeline_mode<synchronous>, transform_indices = @transform_5, window_bounds = array<i64: 48, 32>}, {pipeline_mode = #tpu.pipeline_mode<synchronous>, transform_indices = @transform_6, window_bounds = array<i64: 1, 32>}, {pipeline_mode = #tpu.pipeline_mode<synchronous>, transform_indices = @transform_7, window_bounds = array<i64: 1, 32>}, {transform_indices = @transform_8, window_bounds = array<i64: 1, 1>}, {transform_indices = @transform_9, window_bounds = array<i64: 32, 1>}]} {
    %c0 = arith.constant 0 : index
    %c0_0 = arith.constant 0 : index
    %0 = vector.load %arg1[%c0, %c0_0] : memref<32x8xf32, #tpu.memory_space<vmem>>, vector<32x8xf32>
    %1 = arith.truncf %0 : vector<32x8xf32> to vector<32x8xbf16>
    %c0_1 = arith.constant 0 : index
    %c0_2 = arith.constant 0 : index
    %2 = vector.load %arg2[%c0_1, %c0_2] : memref<8x64xbf16, #tpu.memory_space<vmem>>, vector<8x64xbf16>
    %cst = arith.constant dense<0.000000e+00> : vector<32x64xf32>
    %3 = tpu.matmul %1, %2, %cst {dimension_numbers = #tpu.dot_dimension_numbers<[1], [0], [0], [1], [0, 0, 1, 1], [], []>} : vector<32x8xbf16>, vector<8x64xbf16>, vector<32x64xf32> -> vector<32x64xf32>
    %c0_3 = arith.constant 0 : index
    %c0_4 = arith.constant 0 : index
    %4 = vector.load %arg3[%c0_3, %c0_4] : memref<1x64xf32, #tpu.memory_space<vmem>>, vector<1x64xf32>
    %5 = vector.broadcast %4 : vector<1x64xf32> to vector<32x64xf32>
    %6 = arith.addf %3, %5 : vector<32x64xf32>
    %cst_5 = arith.constant 0.000000e+00 : f32
    %7 = vector.broadcast %cst_5 : f32 to vector<32x64xf32>
    %8 = arith.maximumf %6, %7 : vector<32x64xf32>
    %9 = arith.truncf %8 : vector<32x64xf32> to vector<32x64xbf16>
    %c0_6 = arith.constant 0 : index
    %c0_7 = arith.constant 0 : index
    %10 = vector.load %arg4[%c0_6, %c0_7] : memref<64x48xbf16, #tpu.memory_space<vmem>>, vector<64x48xbf16>
    %cst_8 = arith.constant dense<0.000000e+00> : vector<32x48xf32>
    %11 = tpu.matmul %9, %10, %cst_8 {dimension_numbers = #tpu.dot_dimension_numbers<[1], [0], [0], [1], [0, 0, 1, 1], [], []>} : vector<32x64xbf16>, vector<64x48xbf16>, vector<32x48xf32> -> vector<32x48xf32>
    %c0_9 = arith.constant 0 : index
    %c0_10 = arith.constant 0 : index
    %12 = vector.load %arg5[%c0_9, %c0_10] : memref<1x48xf32, #tpu.memory_space<vmem>>, vector<1x48xf32>
    %13 = vector.broadcast %12 : vector<1x48xf32> to vector<32x48xf32>
    %14 = arith.addf %11, %13 : vector<32x48xf32>
    %cst_11 = arith.constant 0.000000e+00 : f32
    %15 = vector.broadcast %cst_11 : f32 to vector<32x48xf32>
    %16 = arith.maximumf %14, %15 : vector<32x48xf32>
    %17 = arith.truncf %16 : vector<32x48xf32> to vector<32x48xbf16>
    %c0_12 = arith.constant 0 : index
    %c0_13 = arith.constant 0 : index
    %18 = vector.load %arg6[%c0_12, %c0_13] : memref<48x32xbf16, #tpu.memory_space<vmem>>, vector<48x32xbf16>
    %cst_14 = arith.constant dense<0.000000e+00> : vector<32x32xf32>
    %19 = tpu.matmul %17, %18, %cst_14 {dimension_numbers = #tpu.dot_dimension_numbers<[1], [0], [0], [1], [0, 0, 1, 1], [], []>} : vector<32x48xbf16>, vector<48x32xbf16>, vector<32x32xf32> -> vector<32x32xf32>
    %c0_15 = arith.constant 0 : index
    %c0_16 = arith.constant 0 : index
    %20 = vector.load %arg7[%c0_15, %c0_16] : memref<1x32xf32, #tpu.memory_space<vmem>>, vector<1x32xf32>
    %21 = vector.broadcast %20 : vector<1x32xf32> to vector<32x32xf32>
    %22 = arith.addf %19, %21 : vector<32x32xf32>
    %cst_17 = arith.constant 0.000000e+00 : f32
    %23 = vector.broadcast %cst_17 : f32 to vector<32x32xf32>
    %24 = arith.maximumf %22, %23 : vector<32x32xf32>
    %c0_18 = arith.constant 0 : index
    %c0_19 = arith.constant 0 : index
    %25 = vector.load %arg8[%c0_18, %c0_19] : memref<1x32xf32, #tpu.memory_space<vmem>>, vector<1x32xf32>
    %26 = vector.broadcast %25 : vector<1x32xf32> to vector<32x32xf32>
    %27 = arith.mulf %24, %26 : vector<32x32xf32>
    %cst_20 = arith.constant dense<0.000000e+00> : vector<32xf32>
    %28 = vector.multi_reduction <add>, %27, %cst_20 [1] : vector<32x32xf32> to vector<32xf32>
    %29 = vector.shape_cast %28 : vector<32xf32> to vector<32x1xf32>
    %c0_21 = arith.constant 0 : index
    %c0_22 = arith.constant 0 : index
    %30 = memref.load %arg9[%c0_21, %c0_22] : memref<1x1xf32, #tpu.memory_space<smem>>
    %31 = vector.broadcast %30 : f32 to vector<32x1xf32>
    %32 = arith.addf %29, %31 : vector<32x1xf32>
    %c0_23 = arith.constant 0 : index
    %c0_24 = arith.constant 0 : index
    %33 = vector.load %arg10[%c0_23, %c0_24] : memref<32x1xf32, #tpu.memory_space<vmem>>, vector<32x1xf32>
    tpu.vector_store %arg10[%c0_23, %c0_24], %32 {strides = array<i32>} : memref<32x1xf32, #tpu.memory_space<vmem>>, vector<32x1xf32>,
    return
  }
  func.func @transform_0(%arg0: i32) -> (i32, i32) {
    %c0_i32 = arith.constant 0 : i32
    %c0_i32_0 = arith.constant 0 : i32
    return %arg0, %c0_i32 : i32, i32
  }
  func.func @transform_1(%arg0: i32) -> (i32, i32) {
    %c0_i32 = arith.constant 0 : i32
    %c0_i32_0 = arith.constant 0 : i32
    %c0_i32_1 = arith.constant 0 : i32
    return %c0_i32, %c0_i32_0 : i32, i32
  }
  func.func @transform_2(%arg0: i32) -> (i32, i32) {
    %c0_i32 = arith.constant 0 : i32
    %c0_i32_0 = arith.constant 0 : i32
    %c0_i32_1 = arith.constant 0 : i32
    return %c0_i32, %c0_i32_0 : i32, i32
  }
  func.func @transform_3(%arg0: i32) -> (i32, i32) {
    %c0_i32 = arith.constant 0 : i32
    %c0_i32_0 = arith.constant 0 : i32
    %c0_i32_1 = arith.constant 0 : i32
    return %c0_i32, %c0_i32_0 : i32, i32
  }
  func.func @transform_4(%arg0: i32) -> (i32, i32) {
    %c0_i32 = arith.constant 0 : i32
    %c0_i32_0 = arith.constant 0 : i32
    %c0_i32_1 = arith.constant 0 : i32
    return %c0_i32, %c0_i32_0 : i32, i32
  }
  func.func @transform_5(%arg0: i32) -> (i32, i32) {
    %c0_i32 = arith.constant 0 : i32
    %c0_i32_0 = arith.constant 0 : i32
    %c0_i32_1 = arith.constant 0 : i32
    return %c0_i32, %c0_i32_0 : i32, i32
  }
  func.func @transform_6(%arg0: i32) -> (i32, i32) {
    %c0_i32 = arith.constant 0 : i32
    %c0_i32_0 = arith.constant 0 : i32
    %c0_i32_1 = arith.constant 0 : i32
    return %c0_i32, %c0_i32_0 : i32, i32
  }
  func.func @transform_7(%arg0: i32) -> (i32, i32) {
    %c0_i32 = arith.constant 0 : i32
    %c0_i32_0 = arith.constant 0 : i32
    %c0_i32_1 = arith.constant 0 : i32
    return %c0_i32, %c0_i32_0 : i32, i32
  }
  func.func @transform_8(%arg0: i32) -> (i32, i32) {
    %c0_i32 = arith.constant 0 : i32
    %c0_i32_0 = arith.constant 0 : i32
    %c0_i32_1 = arith.constant 0 : i32
    return %c0_i32, %c0_i32_0 : i32, i32
  }
  func.func @transform_9(%arg0: i32) -> (i32, i32) {
    %c0_i32 = arith.constant 0 : i32
    %c0_i32_0 = arith.constant 0 : i32
    return %arg0, %c0_i32 : i32, i32
  }
}

</mosaic_0001>

<llo_original>
// kernel: tpu_custom_call.1
$region0: #{tpu_custom_call.1}
  #allocation0 [shape = 'u32[]', space=smem, size = 0x4, offset = 0x4, fixed_abs, tag = 'smem constant byte address 0x4 - core index']
  #allocation1 [shape = 'u32[72,128]{1,0:T(1,128)}', space=vmem, size = 0x9000, scoped, tag = 'internal scratch']
  #allocation2 [shape = 'f32[1,1]{1,0:T(1,128)S(6)}', space=smem, size = 0x200, scoped, tag = 'scoped memory for tpu_custom_call.1']
  %s0 = inlined_call_operand.vmem [shape: f32[32,8], index: 0, kind: input, shape index: {}]
  %s1 = inlined_call_operand.vmem [shape: bf16[8,64], index: 1, kind: input, shape index: {}]
  %s2 = inlined_call_operand.vmem [shape: f32[1,64], index: 2, kind: input, shape index: {}]
  %s3 = inlined_call_operand.vmem [shape: bf16[64,48], index: 3, kind: input, shape index: {}]
  %s4 = inlined_call_operand.vmem [shape: f32[1,48], index: 4, kind: input, shape index: {}]
  %s5 = inlined_call_operand.vmem [shape: bf16[48,32], index: 5, kind: input, shape index: {}]
  %s6 = inlined_call_operand.vmem [shape: f32[1,32], index: 6, kind: input, shape index: {}]
  %s7 = inlined_call_operand.vmem [shape: f32[1,32], index: 7, kind: input, shape index: {}]
  %s8 = inlined_call_operand.<no memory space> [shape: f32[1,1], index: 8, kind: input, shape index: {}]
  %s9 = inlined_call_operand.vmem [shape: f32[32,1], index: 9, kind: output, shape index: {}]
  %s10 = sld [smem:[#allocation0]]
  $region46: #{tpu_custom_call.1} parent=0
    _
  %s12 = ssub.s32 1, %s10
  %s13 = scalar_select 0, %s12, %s10
  %14 = sst [smem:[#allocation2]] %s8
  // Predicated region
  $region2: #{tpu_custom_call.1} parent=0 // pred_check
    _
  $region3: #{tpu_custom_call.1} parent=0 // pred_check_branch
    %16 = sbr.rel (0) target = $region5
  $region4: #{tpu_custom_call.1} parent=0 // pred_region
    _
  $region5: #{tpu_custom_call.1} parent=0 // pred_fallthru
    _
  // Predicated region
  $region6: #{tpu_custom_call.1} parent=0 // pred_check
    _
  $region7: #{tpu_custom_call.1} parent=0 // pred_check_branch
    %18 = sbr.rel (0) target = $region9
  $region8: #{tpu_custom_call.1} parent=0 // pred_region
    _
  $region9: #{tpu_custom_call.1} parent=0 // pred_fallthru
    _
  // Predicated region
  $region10: #{tpu_custom_call.1} parent=0 // pred_check
    _
  $region11: #{tpu_custom_call.1} parent=0 // pred_check_branch
    %20 = sbr.rel (0) target = $region13
  $region12: #{tpu_custom_call.1} parent=0 // pred_region
    _
  $region13: #{tpu_custom_call.1} parent=0 // pred_fallthru
    _
  // Predicated region
  $region14: #{tpu_custom_call.1} parent=0 // pred_check
    _
  $region15: #{tpu_custom_call.1} parent=0 // pred_check_branch
    %22 = sbr.rel (0) target = $region17
  $region16: #{tpu_custom_call.1} parent=0 // pred_region
    _
  $region17: #{tpu_custom_call.1} parent=0 // pred_fallthru
    _
  // Predicated region
  $region18: #{tpu_custom_call.1} parent=0 // pred_check
    _
  $region19: #{tpu_custom_call.1} parent=0 // pred_check_branch
    %24 = sbr.rel (0) target = $region21
  $region20: #{tpu_custom_call.1} parent=0 // pred_region
    _
  $region21: #{tpu_custom_call.1} parent=0 // pred_fallthru
    _
  // Predicated region
  $region22: #{tpu_custom_call.1} parent=0 // pred_check
    _
  $region23: #{tpu_custom_call.1} parent=0 // pred_check_branch
    %26 = sbr.rel (0) target = $region25
  $region24: #{tpu_custom_call.1} parent=0 // pred_region
    _
  $region25: #{tpu_custom_call.1} parent=0 // pred_fallthru
    _
  // Predicated region
  $region26: #{tpu_custom_call.1} parent=0 // pred_check
    _
  $region27: #{tpu_custom_call.1} parent=0 // pred_check_branch
    %28 = sbr.rel (0) target = $region29
  $region28: #{tpu_custom_call.1} parent=0 // pred_region
    _
  $region29: #{tpu_custom_call.1} parent=0 // pred_fallthru
    _
  // Predicated region
  $region30: #{tpu_custom_call.1} parent=0 // pred_check
    _
  $region31: #{tpu_custom_call.1} parent=0 // pred_check_branch
    %30 = sbr.rel (0) target = $region33
  $region32: #{tpu_custom_call.1} parent=0 // pred_region
    _
  $region33: #{tpu_custom_call.1} parent=0 // pred_fallthru
    _
  // Predicated region
  $region34: #{tpu_custom_call.1} parent=0 // pred_check
    _
  $region35: #{tpu_custom_call.1} parent=0 // pred_check_branch
    %32 = sbr.rel (0) target = $region37
  $region36: #{tpu_custom_call.1} parent=0 // pred_region
    _
  $region37: #{tpu_custom_call.1} parent=0 // pred_fallthru
    _
  %v34 = vld [vmem:[%s0] sm:$0xff]
  %v35 = vld [vmem:[%s0 + $0x8] sm:$0xff]
  %v36 = vld [vmem:[%s0 + $0x10] sm:$0xff]
  %v37 = vld [vmem:[%s0 + $0x18] sm:$0xff]
  %v38 = vpack.c.bf16 %v35, %v34
  %v39 = vpack.c.bf16 %v37, %v36
  %v40 = vld [vmem:[%s1] sm:$0xf]
  %v41 = vld [vmem:[%s2] sm:$0x1]
  %v43 = vperm.slane %v41, 0
  %vm45 = vcmask 64512
  %v47 = vsel %vm45, %v38, 0
  %v50 = vsel %vm45, %v39, 0
  %vm52 = vcmask 1043456
  %v54 = vsel %vm52, %v40, 0
  %56 = vmatpush.bf16.msra.mxu0 0
  %57 = vmatpush.bf16.msra.mxu0 0
  %58 = vmatpush.bf16.msra.mxu0 0
  %59 = vmatpush.bf16.msra.mxu0 0
  %60 = vmatpush.bf16.msra.mxu0 0
  %61 = vmatpush.bf16.msra.mxu0 0
  %62 = vmatpush.bf16.msra.mxu0 0
  %63 = vmatpush.bf16.msra.mxu0 %v54
  %64 = vmatmul.bf16.gmra.mxu0 %v47
  %v65 = vpop.f32.mrf.mxu0
  %v66 = vadd.f32 %v43, %v65
  %v67 = vpop.f32.mrf.mxu0
  %v68 = vadd.f32 %v43, %v67
  %69 = vmatmul.bf16.gmra.mxu0 %v50
  %v70 = vpop.f32.mrf.mxu0
  %v71 = vadd.f32 %v43, %v70
  %v72 = vpop.f32.mrf.mxu0
  %v73 = vadd.f32 %v43, %v72
  %74 = vdwg.mxu0
  %v75 = vmax.f32 %v66, 0.0
  %v76 = vmax.f32 %v68, 0.0
  %v77 = vmax.f32 %v71, 0.0
  %v78 = vmax.f32 %v73, 0.0
  %v79 = vpack.c.bf16 %v76, %v75
  %v80 = vpack.c.bf16 %v78, %v77
  %v81 = vld [vmem:[%s3] sm:$0xf]
  %v82 = vld [vmem:[%s3 + $0x4] sm:$0xf]
  %v83 = vld [vmem:[%s3 + $0x8] sm:$0xf]
  %v84 = vld [vmem:[%s3 + $0xc] sm:$0xf]
  %v85 = vld [vmem:[%s3 + $0x10] sm:$0xf]
  %v86 = vld [vmem:[%s3 + $0x14] sm:$0xf]
  %v87 = vld [vmem:[%s3 + $0x18] sm:$0xf]
  %v88 = vld [vmem:[%s3 + $0x1c] sm:$0xf]
  %v89 = vld [vmem:[%s4] sm:$0x1]
  %v91 = vperm.slane %v89, 0
  %v101 = vunpack.c.l.b16 %v81
  %v102 = vunpack.c.l.b16 %v82
  %v103 = vunpack.c.l.b16 %v83
  %v104 = vunpack.c.l.b16 %v84
  %v105 = vunpack.c.l.b16 %v85
  %v106 = vunpack.c.l.b16 %v86
  %v107 = vunpack.c.l.b16 %v87
  %v108 = vunpack.c.l.b16 %v88
  %v109 = vpack.c.b16 %v102, %v101
  %v110 = vpack.c.b16 %v104, %v103
  %v111 = vpack.c.b16 %v106, %v105
  %v112 = vpack.c.b16 %v108, %v107
  %vm117 = vcmask 523264
  %v119 = vsel %vm117, %v79, 0
  %v122 = vsel %vm117, %v80, 0
  %124 = vmatpush.bf16.msra.mxu0 0
  %125 = vmatpush.bf16.msra.mxu0 0
  %126 = vmatpush.bf16.msra.mxu0 0
  %127 = vmatpush.bf16.msra.mxu0 0
  %128 = vmatpush.bf16.msra.mxu0 %v112
  %129 = vmatpush.bf16.msra.mxu0 %v111
  %130 = vmatpush.bf16.msra.mxu0 %v110
  %131 = vmatpush.bf16.msra.mxu0 %v109
  %132 = vmatmul.bf16.gmra.mxu0 %v119
  %v133 = vpop.f32.mrf.mxu0
  %v134 = vadd.f32 %v91, %v133
  %v135 = vpop.f32.mrf.mxu0
  %v136 = vadd.f32 %v91, %v135
  %137 = vmatmul.bf16.gmra.mxu0 %v122
  %v138 = vpop.f32.mrf.mxu0
  %v139 = vadd.f32 %v91, %v138
  %v140 = vpop.f32.mrf.mxu0
  %v141 = vadd.f32 %v91, %v140
  %142 = vdwg.mxu0
  %v143 = vmax.f32 %v134, 0.0
  %v144 = vmax.f32 %v136, 0.0
  %v145 = vmax.f32 %v139, 0.0
  %v146 = vmax.f32 %v141, 0.0
  %v147 = vpack.c.bf16 %v144, %v143
  %v148 = vpack.c.bf16 %v146, %v145
  %v149 = vld [vmem:[%s5] sm:$0xf]
  %v150 = vld [vmem:[%s5 + $0x4] sm:$0xf]
  %v151 = vld [vmem:[%s5 + $0x8] sm:$0xf]
  %v152 = vld [vmem:[%s5 + $0xc] sm:$0xf]
  %v153 = vld [vmem:[%s5 + $0x10] sm:$0xf]
  %v154 = vld [vmem:[%s5 + $0x14] sm:$0xf]
  %v155 = vld [vmem:[%s6] sm:$0x1]
  %v157 = vperm.slane %v155, 0
  %v165 = vunpack.c.l.b16 %v149
  %v166 = vunpack.c.l.b16 %v150
  %v167 = vunpack.c.l.b16 %v151
  %v168 = vunpack.c.l.b16 %v152
  %v169 = vunpack.c.l.b16 %v153
  %v170 = vunpack.c.l.b16 %v154
  %v171 = vpack.c.b16 %v166, %v165
  %v172 = vpack.c.b16 %v168, %v167
  %v173 = vpack.c.b16 %v170, %v169
  %vm177 = vcmask 392192
  %v179 = vsel %vm177, %v147, 0
  %v182 = vsel %vm177, %v148, 0
  %184 = vmatpush.bf16.msra.mxu0 0
  %185 = vmatpush.bf16.msra.mxu0 0
  %186 = vmatpush.bf16.msra.mxu0 0
  %187 = vmatpush.bf16.msra.mxu0 0
  %188 = vmatpush.bf16.msra.mxu0 0
  %189 = vmatpush.bf16.msra.mxu0 %v173
  %190 = vmatpush.bf16.msra.mxu0 %v172
  %191 = vmatpush.bf16.msra.mxu0 %v171
  %192 = vmatmul.bf16.gmra.mxu0 %v179
  %v193 = vpop.f32.mrf.mxu0
  %v194 = vadd.f32 %v157, %v193
  %v195 = vpop.f32.mrf.mxu0
  %v196 = vadd.f32 %v157, %v195
  %197 = vmatmul.bf16.gmra.mxu0 %v182
  %v198 = vpop.f32.mrf.mxu0
  %v199 = vadd.f32 %v157, %v198
  %v200 = vpop.f32.mrf.mxu0
  %v201 = vadd.f32 %v157, %v200
  %202 = vdwg.mxu0
  %v203 = vmax.f32 %v194, 0.0
  %v204 = vmax.f32 %v196, 0.0
  %v205 = vmax.f32 %v199, 0.0
  %v206 = vmax.f32 %v201, 0.0
  %v207 = vld [vmem:[%s7] sm:$0x1]
  %v209 = vperm.slane %v207, 0
  %v211 = vmul.f32 %v203, %v209
  %v212 = vmul.f32 %v204, %v209
  %v213 = vmul.f32 %v205, %v209
  %v214 = vmul.f32 %v206, %v209
  %vm215 = vcmask 261120
  %v216 = vsel %vm215, %v211, 0.0
  %217 = vadd.xlane.f32.xlu0 %v216
  %v218 = vpop.xlane.xlu0 %217
  %v219 = vsel %vm215, %v212, 0.0
  %220 = vadd.xlane.f32.xlu0 %v219
  %v221 = vpop.xlane.xlu0 %220
  %v222 = vsel %vm215, %v213, 0.0
  %223 = vadd.xlane.f32.xlu0 %v222
  %v224 = vpop.xlane.xlu0 %223
  %v225 = vsel %vm215, %v214, 0.0
  %226 = vadd.xlane.f32.xlu0 %v225
  %v227 = vpop.xlane.xlu0 %226
  %s228 = sld [smem:[#allocation2]]
  %v229 = vstv %s228
  %v230 = vadd.f32 %v218, %v229
  %v231 = vadd.f32 %v221, %v229
  %v232 = vadd.f32 %v224, %v229
  %v233 = vadd.f32 %v227, %v229
  %vm234 = vcmask 7168
  %235 = vst.msk [vmem:[%s9] sm:$0xff] %vm234, %v230
  %236 = vst.msk [vmem:[%s9 + $0x8] sm:$0xff] %vm234, %v231
  %237 = vst.msk [vmem:[%s9 + $0x10] sm:$0xff] %vm234, %v232
  %238 = vst.msk [vmem:[%s9 + $0x18] sm:$0xff] %vm234, %v233
  // Predicated region
  $region38: #{tpu_custom_call.1} parent=0 // pred_check
    _
  $region39: #{tpu_custom_call.1} parent=0 // pred_check_branch
    %240 = sbr.rel (0) target = $region41
  $region40: #{tpu_custom_call.1} parent=0 // pred_region
    _
  $region41: #{tpu_custom_call.1} parent=0 // pred_fallthru
    _
  // Predicated region
  $region42: #{tpu_custom_call.1} parent=0 // pred_check
    _
  $region43: #{tpu_custom_call.1} parent=0 // pred_check_branch
    %242 = sbr.rel (0) target = $region45
  $region44: #{tpu_custom_call.1} parent=0 // pred_region
    _
  $region45: #{tpu_custom_call.1} parent=0 // pred_fallthru
    _

</llo_original>
